<compile_context>
chip_gen: v7x
topology: tpu7x:2x2x1
jax: 0.10.0
libtpu: 0.0.40
codegen_flags: <defaults>
</compile_context>

<pallas_src>
import functools

import jax
import jax.numpy as jnp
from jax.experimental import pallas as pl
from jax.experimental.pallas import tpu as pltpu

LANE = 128


def _round_up(x, m):
    return ((x + m - 1) // m) * m


def policy_kernel(x_ref, w1_ref, b1_ref, w2_ref, b2_ref, w3_ref, b3_ref,
                  p0_ref, p1_ref, p2_ref, q_ref, out_ref, *, f):
    # fc1 + LeakyReLU(0.2)   (bf16 matmul inputs, f32 accumulate)
    x = x_ref[...].astype(jnp.bfloat16)
    h = jnp.dot(x, w1_ref[...], preferred_element_type=jnp.float32) + b1_ref[...]
    h = jnp.maximum(h, 0.2 * h)

    # fc2 + LeakyReLU(0.2)
    h = jnp.dot(h.astype(jnp.bfloat16), w2_ref[...],
                preferred_element_type=jnp.float32) + b2_ref[...]
    h = jnp.maximum(h, 0.2 * h)

    # fc3 logits, class-major layout: lanes [0:f) class0, [f:2f) class1,
    # [2f:3f) class2, remaining lanes zero pad (total width round_up(3f, 128)).
    logits = jnp.dot(h.astype(jnp.bfloat16), w3_ref[...],
                     preferred_element_type=jnp.float32) + b3_ref[...]

    l0 = logits[:, 0 * f:1 * f]
    l1 = logits[:, 1 * f:2 * f]
    l2 = logits[:, 2 * f:3 * f]

    # numerically-stable exponentials per feature triple
    m = jnp.maximum(jnp.maximum(l0, l1), l2)
    e0 = jnp.exp(l0 - m)
    e1 = jnp.exp(l1 - m)
    e2 = jnp.exp(l2 - m)

    # Scatter the class-major exponentials into the natural interleaved order
    # (lane 3f + c) with 0/1 permutation matmuls (exact copies), then rebuild the
    # per-triple denominator FROM the scattered lanes (Q triple-sum matmul) and
    # divide exactly.  Every triple therefore divides by exactly the sum of its
    # own three stored numerators -> probabilities sum to 1 to f32 accuracy.
    num = (jnp.dot(e0, p0_ref[...], preferred_element_type=jnp.float32)
           + jnp.dot(e1, p1_ref[...], preferred_element_type=jnp.float32)
           + jnp.dot(e2, p2_ref[...], preferred_element_type=jnp.float32))
    den = jnp.dot(num, q_ref[...], preferred_element_type=jnp.float32)
    out_ref[...] = num / jnp.where(den > 0.0, den, 1.0)   # pad lanes -> 0, no NaN


def prepare_params(params):
    """One-time preprocessing (hoisted out of the per-call hot path)."""
    w1, b1, w2, b2, w3, b3 = (jnp.asarray(p) for p in params)
    hidden, F = w1.shape
    Fp3 = _round_up(3 * F, LANE)

    w1_t = w1.T.astype(jnp.bfloat16)                       # [F, hidden]
    w2_t = w2.T.astype(jnp.bfloat16)                       # [hidden, hidden]

    # w3: [3F, hidden], torch row index = f*3 + c.  Regroup class-major
    # (column c*F + f) and zero-pad the COMBINED width once to Fp3.
    w3_cm = jnp.transpose(w3.reshape(F, 3, hidden), (1, 0, 2)).reshape(3 * F, hidden)
    w3_t = jnp.pad(w3_cm.T, ((0, 0), (0, Fp3 - 3 * F))).astype(jnp.bfloat16)

    b3_cm = b3.reshape(F, 3).T.reshape(1, 3 * F)
    b3_p = jnp.pad(b3_cm, ((0, 0), (0, Fp3 - 3 * F))).astype(jnp.float32)

    # 0/1 scatter matrices: P_c[f, 3f + c] = 1   (class-major -> interleaved).
    rows = jnp.arange(F)

    def scatter(c):
        return jnp.zeros((F, Fp3), jnp.float32).at[rows, 3 * rows + c].set(1.0)

    # Q[i, j] = 1 iff lanes i, j belong to the same feature triple (i, j < 3F).
    idx = jnp.arange(Fp3)
    valid = idx < 3 * F
    same = (idx[:, None] // 3) == (idx[None, :] // 3)
    q = jnp.where(same & valid[:, None] & valid[None, :], 1.0, 0.0).astype(jnp.float32)

    return (w1_t, b1.reshape(1, -1).astype(jnp.float32),
            w2_t, b2.reshape(1, -1).astype(jnp.float32),
            w3_t, b3_p,
            scatter(0), scatter(1), scatter(2), q)


@functools.partial(jax.jit, static_argnames=("block_batch",))
def policy_forward(obs, prep, block_batch=1024):
    """obs: [batch, input_dim] f32, prep = prepare_params(params).
    Returns prob [batch, input_dim, 3] (matches the torch module, expl=False)."""
    w1_t, b1, w2_t, b2, w3_t, b3, p0, p1, p2, q = prep
    batch, F = obs.shape
    Fp3 = w3_t.shape[1]

    # Row tile: multiple of 8 sublanes, capped, and split into >=2 grid steps
    # whenever batch allows so both v7x TensorCores get work ("parallel" axis).
    tb = max(8, min(block_batch, _round_up(-(-batch // 2), 8)))
    grid = (pl.cdiv(batch, tb),)

    weight_bytes = sum(int(a.size) * a.dtype.itemsize
                       for a in (w1_t, b1, w2_t, b2, w3_t, b3, p0, p1, p2, q))
    vmem_limit = int(min(
        64 * 1024 * 1024,
        max(32 * 1024 * 1024,
            2 * tb * (F + Fp3) * 4        # double-buffered obs / out tiles
            + 2 * weight_bytes            # resident params (double-buffer worst case)
            + 8 * tb * Fp3 * 4)))         # logits / h / softmax temporaries slack

    out = pl.pallas_call(
        functools.partial(policy_kernel, f=F),
        out_shape=jax.ShapeDtypeStruct((batch, Fp3), jnp.float32),
        grid=grid,
        in_specs=[
            pl.BlockSpec((tb, F), lambda i: (i, 0)),        # obs (row-tiled)
            pl.BlockSpec(w1_t.shape, lambda i: (0, 0)),     # w1^T (resident, bf16)
            pl.BlockSpec(b1.shape, lambda i: (0, 0)),       # b1
            pl.BlockSpec(w2_t.shape, lambda i: (0, 0)),     # w2^T (bf16)
            pl.BlockSpec(b2.shape, lambda i: (0, 0)),       # b2
            pl.BlockSpec(w3_t.shape, lambda i: (0, 0)),     # w3^T class-major, padded (bf16)
            pl.BlockSpec(b3.shape, lambda i: (0, 0)),       # b3 class-major, padded
            pl.BlockSpec(p0.shape, lambda i: (0, 0)),       # scatter class 0
            pl.BlockSpec(p1.shape, lambda i: (0, 0)),       # scatter class 1
            pl.BlockSpec(p2.shape, lambda i: (0, 0)),       # scatter class 2
            pl.BlockSpec(q.shape, lambda i: (0, 0)),        # triple-sum matrix
        ],
        out_specs=pl.BlockSpec((tb, Fp3), lambda i: (i, 0)),
        compiler_params=pltpu.CompilerParams(
            dimension_semantics=("parallel",),
            vmem_limit_bytes=vmem_limit),
    )(obs, w1_t, b1, w2_t, b2, w3_t, b3, p0, p1, p2, q)

    # Output lanes are already in natural interleaved order (lane 3f + c):
    # strip the pad and reshape -- no transpose, no narrow-lane stores.
    return out[:, :3 * F].reshape(batch, F, 3)


def policy_forward_ref(obs, params):
    """Pure-JAX f32 reference mirroring the PyTorch module (expl=False path)."""
    w1, b1, w2, b2, w3, b3 = params

    def lrelu(x):
        return jnp.where(x > 0, x, 0.2 * x)

    h = lrelu(obs @ w1.T + b1)
    h = lrelu(h @ w2.T + b2)
    h = h @ w3.T + b3
    out = h.reshape(obs.shape[0], -1, 3)
    return jax.nn.softmax(out, axis=-1)


def policy_forward_ref_matched(obs, params):
    """Reference with the kernel's matmul precision (bf16 inputs, f32 accumulate)."""
    w1, b1, w2, b2, w3, b3 = params
    bf = lambda a: a.astype(jnp.bfloat16)

    def lrelu(x):
        return jnp.maximum(x, 0.2 * x)

    h = lrelu(jnp.dot(bf(obs), bf(w1.T), preferred_element_type=jnp.float32) + b1)
    h = lrelu(jnp.dot(bf(h), bf(w2.T), preferred_element_type=jnp.float32) + b2)
    logits = jnp.dot(bf(h), bf(w3.T), preferred_element_type=jnp.float32) + b3
    out = logits.reshape(obs.shape[0], -1, 3)
    return jax.nn.softmax(out, axis=-1)


def init_params(key, input_dim, hidden_dim):
    """Deterministic init matching torch.nn.Linear shapes (uniform(-k, k))."""
    ks = jax.random.split(key, 6)

    def lin(kw, kb, fan_in, fan_out):
        bound = 1.0 / jnp.sqrt(fan_in)
        w = jax.random.uniform(kw, (fan_out, fan_in), jnp.float32, -bound, bound)
        b = jax.random.uniform(kb, (fan_out,), jnp.float32, -bound, bound)
        return w, b

    w1, b1 = lin(ks[0], ks[1], input_dim, hidden_dim)
    w2, b2 = lin(ks[2], ks[3], hidden_dim, hidden_dim)
    w3, b3 = lin(ks[4], ks[5], hidden_dim, input_dim * 3)
    return (w1, b1, w2, b2, w3, b3)


if __name__ == "__main__":
    batch, input_dim, hidden_dim = 8, 16, 32

    key = jax.random.PRNGKey(0)
    k_obs, k_params = jax.random.split(key)
    obs = jax.random.normal(k_obs, (batch, input_dim), jnp.float32)
    params = init_params(k_params, input_dim, hidden_dim)

    prep = prepare_params(params)
    prob = jax.block_until_ready(policy_forward(obs, prep))

    ref_matched = policy_forward_ref_matched(obs, params)   # same matmul precision
    ref_f32 = policy_forward_ref(obs, params)                # mirrors the torch module

    assert prob.shape == (batch, input_dim, 3)
    # tight check against the precision-matched reference (validates layout/softmax)
    assert jnp.allclose(prob, ref_matched, atol=1e-2, rtol=1e-2)
    # loose check against the all-f32 torch-style reference (bf16 matmul inputs)
    assert jnp.allclose(prob, ref_f32, atol=3e-2, rtol=3e-2)
    # exact normalization: each per-feature triple sums to 1 to f32 accuracy
    assert jnp.allclose(prob.sum(-1), 1.0, atol=1e-5)
    # TODO(synk): the `expl=True` branch of the original module divides [B,F,3]
    # by [B,F] (broadcast-invalid in general); only the default path is implemented.
    print("KERNEL_OK")
</pallas_src>

<mosaic_0001>
module attributes {stable_mosaic.version = 11 : i64} {
  func.func @policy_kernel(%arg0: i32, %arg1: memref<8x16xf32, #tpu.memory_space<vmem>>, %arg2: memref<16x32xbf16, #tpu.memory_space<vmem>>, %arg3: memref<1x32xf32, #tpu.memory_space<vmem>>, %arg4: memref<32x32xbf16, #tpu.memory_space<vmem>>, %arg5: memref<1x32xf32, #tpu.memory_space<vmem>>, %arg6: memref<32x128xbf16, #tpu.memory_space<vmem>>, %arg7: memref<1x128xf32, #tpu.memory_space<vmem>>, %arg8: memref<16x128xf32, #tpu.memory_space<vmem>>, %arg9: memref<16x128xf32, #tpu.memory_space<vmem>>, %arg10: memref<16x128xf32, #tpu.memory_space<vmem>>, %arg11: memref<128x128xf32, #tpu.memory_space<vmem>>, %arg12: memref<8x128xf32, #tpu.memory_space<vmem>>) attributes {dimension_semantics = [#tpu.dimension_semantics<parallel>], iteration_bounds = array<i64: 1>, scalar_prefetch = 0 : i64, scratch_operands = 0 : i64, tpu.core_type = #tpu.core_type<tc>, window_params = [{transform_indices = @transform_0, window_bounds = array<i64: 8, 16>}, {pipeline_mode = #tpu.pipeline_mode<synchronous>, transform_indices = @transform_1, window_bounds = array<i64: 16, 32>}, {pipeline_mode = #tpu.pipeline_mode<synchronous>, transform_indices = @transform_2, window_bounds = array<i64: 1, 32>}, {pipeline_mode = #tpu.pipeline_mode<synchronous>, transform_indices = @transform_3, window_bounds = array<i64: 32, 32>}, {pipeline_mode = #tpu.pipeline_mode<synchronous>, transform_indices = @transform_4, window_bounds = array<i64: 1, 32>}, {pipeline_mode = #tpu.pipeline_mode<synchronous>, transform_indices = @transform_5, window_bounds = array<i64: 32, 128>}, {pipeline_mode = #tpu.pipeline_mode<synchronous>, transform_indices = @transform_6, window_bounds = array<i64: 1, 128>}, {pipeline_mode = #tpu.pipeline_mode<synchronous>, transform_indices = @transform_7, window_bounds = array<i64: 16, 128>}, {pipeline_mode = #tpu.pipeline_mode<synchronous>, transform_indices = @transform_8, window_bounds = array<i64: 16, 128>}, {pipeline_mode = #tpu.pipeline_mode<synchronous>, transform_indices = @transform_9, window_bounds = array<i64: 16, 128>}, {pipeline_mode = #tpu.pipeline_mode<synchronous>, transform_indices = @transform_10, window_bounds = array<i64: 128, 128>}, {transform_indices = @transform_11, window_bounds = array<i64: 8, 128>}]} {
    %c0 = arith.constant 0 : index
    %c0_0 = arith.constant 0 : index
    %0 = vector.load %arg1[%c0, %c0_0] : memref<8x16xf32, #tpu.memory_space<vmem>>, vector<8x16xf32>
    %1 = arith.truncf %0 : vector<8x16xf32> to vector<8x16xbf16>
    %c0_1 = arith.constant 0 : index
    %c0_2 = arith.constant 0 : index
    %2 = vector.load %arg2[%c0_1, %c0_2] : memref<16x32xbf16, #tpu.memory_space<vmem>>, vector<16x32xbf16>
    %cst = arith.constant dense<0.000000e+00> : vector<8x32xf32>
    %3 = tpu.matmul %1, %2, %cst {dimension_numbers = #tpu.dot_dimension_numbers<[1], [0], [0], [1], [0, 0, 1, 1], [], []>} : vector<8x16xbf16>, vector<16x32xbf16>, vector<8x32xf32> -> vector<8x32xf32>
    %c0_3 = arith.constant 0 : index
    %c0_4 = arith.constant 0 : index
    %4 = vector.load %arg3[%c0_3, %c0_4] : memref<1x32xf32, #tpu.memory_space<vmem>>, vector<1x32xf32>
    %5 = vector.broadcast %4 : vector<1x32xf32> to vector<8x32xf32>
    %6 = arith.addf %3, %5 : vector<8x32xf32>
    %cst_5 = arith.constant 2.000000e-01 : f32
    %7 = vector.broadcast %cst_5 : f32 to vector<8x32xf32>
    %8 = arith.mulf %7, %6 : vector<8x32xf32>
    %9 = arith.maximumf %6, %8 : vector<8x32xf32>
    %10 = arith.truncf %9 : vector<8x32xf32> to vector<8x32xbf16>
    %c0_6 = arith.constant 0 : index
    %c0_7 = arith.constant 0 : index
    %11 = vector.load %arg4[%c0_6, %c0_7] : memref<32x32xbf16, #tpu.memory_space<vmem>>, vector<32x32xbf16>
    %cst_8 = arith.constant dense<0.000000e+00> : vector<8x32xf32>
    %12 = tpu.matmul %10, %11, %cst_8 {dimension_numbers = #tpu.dot_dimension_numbers<[1], [0], [0], [1], [0, 0, 1, 1], [], []>} : vector<8x32xbf16>, vector<32x32xbf16>, vector<8x32xf32> -> vector<8x32xf32>
    %c0_9 = arith.constant 0 : index
    %c0_10 = arith.constant 0 : index
    %13 = vector.load %arg5[%c0_9, %c0_10] : memref<1x32xf32, #tpu.memory_space<vmem>>, vector<1x32xf32>
    %14 = vector.broadcast %13 : vector<1x32xf32> to vector<8x32xf32>
    %15 = arith.addf %12, %14 : vector<8x32xf32>
    %cst_11 = arith.constant 2.000000e-01 : f32
    %16 = vector.broadcast %cst_11 : f32 to vector<8x32xf32>
    %17 = arith.mulf %16, %15 : vector<8x32xf32>
    %18 = arith.maximumf %15, %17 : vector<8x32xf32>
    %19 = arith.truncf %18 : vector<8x32xf32> to vector<8x32xbf16>
    %c0_12 = arith.constant 0 : index
    %c0_13 = arith.constant 0 : index
    %20 = vector.load %arg6[%c0_12, %c0_13] : memref<32x128xbf16, #tpu.memory_space<vmem>>, vector<32x128xbf16>
    %cst_14 = arith.constant dense<0.000000e+00> : vector<8x128xf32>
    %21 = tpu.matmul %19, %20, %cst_14 {dimension_numbers = #tpu.dot_dimension_numbers<[1], [0], [0], [1], [0, 0, 1, 1], [], []>} : vector<8x32xbf16>, vector<32x128xbf16>, vector<8x128xf32> -> vector<8x128xf32>
    %c0_15 = arith.constant 0 : index
    %c0_16 = arith.constant 0 : index
    %22 = vector.load %arg7[%c0_15, %c0_16] : memref<1x128xf32, #tpu.memory_space<vmem>>, vector<1x128xf32>
    %23 = vector.broadcast %22 : vector<1x128xf32> to vector<8x128xf32>
    %24 = arith.addf %21, %23 : vector<8x128xf32>
    %25 = vector.extract_strided_slice %24 {offsets = [0, 0], sizes = [8, 16], strides = [1, 1]} : vector<8x128xf32> to vector<8x16xf32>
    %26 = vector.extract_strided_slice %24 {offsets = [0, 16], sizes = [8, 16], strides = [1, 1]} : vector<8x128xf32> to vector<8x16xf32>
    %27 = vector.extract_strided_slice %24 {offsets = [0, 32], sizes = [8, 16], strides = [1, 1]} : vector<8x128xf32> to vector<8x16xf32>
    %28 = arith.maximumf %25, %26 : vector<8x16xf32>
    %29 = arith.maximumf %28, %27 : vector<8x16xf32>
    %30 = arith.subf %25, %29 : vector<8x16xf32>
    %31 = math.exp %30 : vector<8x16xf32>
    %32 = arith.subf %26, %29 : vector<8x16xf32>
    %33 = math.exp %32 : vector<8x16xf32>
    %34 = arith.subf %27, %29 : vector<8x16xf32>
    %35 = math.exp %34 : vector<8x16xf32>
    %c0_17 = arith.constant 0 : index
    %c0_18 = arith.constant 0 : index
    %36 = vector.load %arg8[%c0_17, %c0_18] : memref<16x128xf32, #tpu.memory_space<vmem>>, vector<16x128xf32>
    %cst_19 = arith.constant dense<0.000000e+00> : vector<8x128xf32>
    %37 = tpu.matmul %31, %36, %cst_19 {dimension_numbers = #tpu.dot_dimension_numbers<[1], [0], [0], [1], [0, 0, 1, 1], [], []>} : vector<8x16xf32>, vector<16x128xf32>, vector<8x128xf32> -> vector<8x128xf32>
    %c0_20 = arith.constant 0 : index
    %c0_21 = arith.constant 0 : index
    %38 = vector.load %arg9[%c0_20, %c0_21] : memref<16x128xf32, #tpu.memory_space<vmem>>, vector<16x128xf32>
    %cst_22 = arith.constant dense<0.000000e+00> : vector<8x128xf32>
    %39 = tpu.matmul %33, %38, %cst_22 {dimension_numbers = #tpu.dot_dimension_numbers<[1], [0], [0], [1], [0, 0, 1, 1], [], []>} : vector<8x16xf32>, vector<16x128xf32>, vector<8x128xf32> -> vector<8x128xf32>
    %40 = arith.addf %37, %39 : vector<8x128xf32>
    %c0_23 = arith.constant 0 : index
    %c0_24 = arith.constant 0 : index
    %41 = vector.load %arg10[%c0_23, %c0_24] : memref<16x128xf32, #tpu.memory_space<vmem>>, vector<16x128xf32>
    %cst_25 = arith.constant dense<0.000000e+00> : vector<8x128xf32>
    %42 = tpu.matmul %35, %41, %cst_25 {dimension_numbers = #tpu.dot_dimension_numbers<[1], [0], [0], [1], [0, 0, 1, 1], [], []>} : vector<8x16xf32>, vector<16x128xf32>, vector<8x128xf32> -> vector<8x128xf32>
    %43 = arith.addf %40, %42 : vector<8x128xf32>
    %c0_26 = arith.constant 0 : index
    %c0_27 = arith.constant 0 : index
    %44 = vector.load %arg11[%c0_26, %c0_27] : memref<128x128xf32, #tpu.memory_space<vmem>>, vector<128x128xf32>
    %cst_28 = arith.constant dense<0.000000e+00> : vector<8x128xf32>
    %45 = tpu.matmul %43, %44, %cst_28 {dimension_numbers = #tpu.dot_dimension_numbers<[1], [0], [0], [1], [0, 0, 1, 1], [], []>} : vector<8x128xf32>, vector<128x128xf32>, vector<8x128xf32> -> vector<8x128xf32>
    %cst_29 = arith.constant 0.000000e+00 : f32
    %46 = vector.broadcast %cst_29 : f32 to vector<8x128xf32>
    %47 = arith.cmpf ogt, %45, %46 : vector<8x128xf32>
    %cst_30 = arith.constant 1.000000e+00 : f32
    %48 = vector.broadcast %cst_30 : f32 to vector<8x128xf32>
    %49 = arith.select %47, %45, %48 : vector<8x128xi1>, vector<8x128xf32>
    %50 = arith.divf %43, %49 : vector<8x128xf32>
    %c0_31 = arith.constant 0 : index
    %c0_32 = arith.constant 0 : index
    %51 = vector.load %arg12[%c0_31, %c0_32] : memref<8x128xf32, #tpu.memory_space<vmem>>, vector<8x128xf32>
    tpu.vector_store %arg12[%c0_31, %c0_32], %50 {strides = array<i32>} : memref<8x128xf32, #tpu.memory_space<vmem>>, vector<8x128xf32>,
    return
  }
  func.func @transform_0(%arg0: i32) -> (i32, i32) {
    %c0_i32 = arith.constant 0 : i32
    %c0_i32_0 = arith.constant 0 : i32
    return %arg0, %c0_i32 : i32, i32
  }
  func.func @transform_1(%arg0: i32) -> (i32, i32) {
    %c0_i32 = arith.constant 0 : i32
    %c0_i32_0 = arith.constant 0 : i32
    %c0_i32_1 = arith.constant 0 : i32
    return %c0_i32, %c0_i32_0 : i32, i32
  }
  func.func @transform_2(%arg0: i32) -> (i32, i32) {
    %c0_i32 = arith.constant 0 : i32
    %c0_i32_0 = arith.constant 0 : i32
    %c0_i32_1 = arith.constant 0 : i32
    return %c0_i32, %c0_i32_0 : i32, i32
  }
  func.func @transform_3(%arg0: i32) -> (i32, i32) {
    %c0_i32 = arith.constant 0 : i32
    %c0_i32_0 = arith.constant 0 : i32
    %c0_i32_1 = arith.constant 0 : i32
    return %c0_i32, %c0_i32_0 : i32, i32
  }
  func.func @transform_4(%arg0: i32) -> (i32, i32) {
    %c0_i32 = arith.constant 0 : i32
    %c0_i32_0 = arith.constant 0 : i32
    %c0_i32_1 = arith.constant 0 : i32
    return %c0_i32, %c0_i32_0 : i32, i32
  }
  func.func @transform_5(%arg0: i32) -> (i32, i32) {
    %c0_i32 = arith.constant 0 : i32
    %c0_i32_0 = arith.constant 0 : i32
    %c0_i32_1 = arith.constant 0 : i32
    return %c0_i32, %c0_i32_0 : i32, i32
  }
  func.func @transform_6(%arg0: i32) -> (i32, i32) {
    %c0_i32 = arith.constant 0 : i32
    %c0_i32_0 = arith.constant 0 : i32
    %c0_i32_1 = arith.constant 0 : i32
    return %c0_i32, %c0_i32_0 : i32, i32
  }
  func.func @transform_7(%arg0: i32) -> (i32, i32) {
    %c0_i32 = arith.constant 0 : i32
    %c0_i32_0 = arith.constant 0 : i32
    %c0_i32_1 = arith.constant 0 : i32
    return %c0_i32, %c0_i32_0 : i32, i32
  }
  func.func @transform_8(%arg0: i32) -> (i32, i32) {
    %c0_i32 = arith.constant 0 : i32
    %c0_i32_0 = arith.constant 0 : i32
    %c0_i32_1 = arith.constant 0 : i32
    return %c0_i32, %c0_i32_0 : i32, i32
  }
  func.func @transform_9(%arg0: i32) -> (i32, i32) {
    %c0_i32 = arith.constant 0 : i32
    %c0_i32_0 = arith.constant 0 : i32
    %c0_i32_1 = arith.constant 0 : i32
    return %c0_i32, %c0_i32_0 : i32, i32
  }
  func.func @transform_10(%arg0: i32) -> (i32, i32) {
    %c0_i32 = arith.constant 0 : i32
    %c0_i32_0 = arith.constant 0 : i32
    %c0_i32_1 = arith.constant 0 : i32
    return %c0_i32, %c0_i32_0 : i32, i32
  }
  func.func @transform_11(%arg0: i32) -> (i32, i32) {
    %c0_i32 = arith.constant 0 : i32
    %c0_i32_0 = arith.constant 0 : i32
    return %arg0, %c0_i32 : i32, i32
  }
}

</mosaic_0001>

<llo_original>
// kernel: policy_forward.1
$region0: #{policy_forward.1}
  #allocation0 [shape = 'u32[]', space=smem, size = 0x4, offset = 0x4, fixed_abs, tag = 'smem constant byte address 0x4 - core index']
  #allocation1 [shape = 'u32[144,128]{1,0:T(1,128)}', space=vmem, size = 0x12000, scoped, tag = 'internal scratch']
  %s0 = inlined_call_operand.hbm [shape: f32[8,16], index: 0, kind: input, shape index: {}]
  %s1 = inlined_call_operand.hbm [shape: bf16[16,32], index: 1, kind: input, shape index: {}]
  %s2 = inlined_call_operand.vmem [shape: f32[1,32], index: 2, kind: input, shape index: {}]
  %s3 = inlined_call_operand.hbm [shape: bf16[32,32], index: 3, kind: input, shape index: {}]
  %s4 = inlined_call_operand.vmem [shape: f32[1,32], index: 4, kind: input, shape index: {}]
  %s5 = inlined_call_operand.vmem [shape: bf16[32,128], index: 5, kind: input, shape index: {}]
  %s6 = inlined_call_operand.hbm [shape: f32[1,128], index: 6, kind: input, shape index: {}]
  %s7 = inlined_call_operand.hbm [shape: f32[16,128], index: 7, kind: input, shape index: {}]
  %s8 = inlined_call_operand.hbm [shape: f32[16,128], index: 8, kind: input, shape index: {}]
  %s9 = inlined_call_operand.vmem [shape: f32[16,128], index: 9, kind: input, shape index: {}]
  %s10 = inlined_call_operand.hbm [shape: f32[128,128], index: 10, kind: input, shape index: {}]
  %s11 = inlined_call_operand.vmem [shape: f32[8,128], index: 11, kind: output, shape index: {}]
  %s12 = sld [smem:[#allocation0]]
  $region82: #{policy_forward.1} parent=0
    _
  %s14 = ssub.s32 1, %s12
  %s15 = scalar_select 0, %s14, %s12
  $region1: #{policy_forward.1} parent=0
    #allocation2 [shape = 'u8[4096]{0}', space=vmem, size = 0x1000, scoped, tag = 'input window, operand 0, single buffered']
    #allocation3 [shape = 's32[1]{0}', space=sflag, size = 0x4, scoped, tag = 'scoped memory for policy_forward.1']
    #allocation4 [shape = 'u8[4096]{0}', space=vmem, size = 0x1000, scoped, tag = 'input window, operand 1, single buffered']
    #allocation5 [shape = 's32[1]{0}', space=sflag, size = 0x4, scoped, tag = 'scoped memory for policy_forward.1']
    #allocation6 [shape = 'u8[8192]{0}', space=vmem, size = 0x2000, scoped, tag = 'input window, operand 3, single buffered']
    #allocation7 [shape = 'u8[512]{0}', space=vmem, size = 0x400, scoped, tag = 'input window, operand 6, single buffered']
    #allocation8 [shape = 's32[1]{0}', space=sflag, size = 0x4, scoped, tag = 'scoped memory for policy_forward.1']
    #allocation9 [shape = 'u8[8192]{0}', space=vmem, size = 0x2000, scoped, tag = 'input window, operand 7, single buffered']
    #allocation10 [shape = 'u8[8192]{0}', space=vmem, size = 0x2000, scoped, tag = 'input window, operand 8, single buffered']
    #allocation11 [shape = 's32[1]{0}', space=sflag, size = 0x4, scoped, tag = 'scoped memory for policy_forward.1']
    #allocation12 [shape = 'u8[65536]{0}', space=vmem, size = 0x10000, scoped, tag = 'input window, operand 10, single buffered']
    %16 = vsyncpa [#allocation3], 0
    %17 = vsyncpa [#allocation5], 0
    %18 = vsyncpa [#allocation8], 0
    %19 = vsyncpa [#allocation11], 0
    // Predicated region
    $region2: #{policy_forward.1} parent=1 // pred_check
      _
    $region3: #{policy_forward.1} parent=1 // pred_check_branch
      %21 = sbr.rel (0) target = $region5
    $region4: #{policy_forward.1} parent=1 // pred_region
      %s23 = ssub.s32 128, 128
      %24 = vsyncadd [#allocation3], %s23
      %s26 = sshll.u32 [#allocation2], 4
      %s27 = int_to_ptr.vmem [resolvable:$true] %s26
      %29 = dma.hbm_to_vmem [thread:$0]  %s0, 128, %s27, [#allocation3]
    $region5: #{policy_forward.1} parent=1 // pred_fallthru
      _
    // Predicated region
    $region6: #{policy_forward.1} parent=1 // pred_check
      _
    $region7: #{policy_forward.1} parent=1 // pred_check_branch
      %31 = sbr.rel (0) target = $region9
    $region8: #{policy_forward.1} parent=1 // pred_region
      %s33 = ssub.s32 128, 128
      %34 = vsyncadd [#allocation5], %s33
      %s35 = sshll.u32 [#allocation4], 4
      %s36 = int_to_ptr.vmem [resolvable:$true] %s35
      %41 = dma.hbm_to_vmem [thread:$0]  %s1, 128, %s36, [#allocation5], 64, 64, 4
    $region9: #{policy_forward.1} parent=1 // pred_fallthru
      _
    // Predicated region
    $region10: #{policy_forward.1} parent=1 // pred_check
      _
    $region11: #{policy_forward.1} parent=1 // pred_check_branch
      %43 = sbr.rel (0) target = $region13
    $region12: #{policy_forward.1} parent=1 // pred_region
      _
    $region13: #{policy_forward.1} parent=1 // pred_fallthru
      _
    // Predicated region
    $region14: #{policy_forward.1} parent=1 // pred_check
      _
    $region15: #{policy_forward.1} parent=1 // pred_check_branch
      %45 = sbr.rel (0) target = $region17
    $region16: #{policy_forward.1} parent=1 // pred_region
      %s47 = ssub.s32 256, 256
      %48 = vsyncadd [#allocation5], %s47
      %s49 = sshll.u32 [#allocation6], 4
      %s50 = int_to_ptr.vmem [resolvable:$true] %s49
      %55 = dma.hbm_to_vmem [thread:$0]  %s3, 256, %s50, [#allocation5], 64, 64, 4
    $region17: #{policy_forward.1} parent=1 // pred_fallthru
      _
    // Predicated region
    $region18: #{policy_forward.1} parent=1 // pred_check
      _
    $region19: #{policy_forward.1} parent=1 // pred_check_branch
      %57 = sbr.rel (0) target = $region21
    $region20: #{policy_forward.1} parent=1 // pred_region
      _
    $region21: #{policy_forward.1} parent=1 // pred_fallthru
      _
    // Predicated region
    $region22: #{policy_forward.1} parent=1 // pred_check
      _
    $region23: #{policy_forward.1} parent=1 // pred_check_branch
      %59 = sbr.rel (0) target = $region25
    $region24: #{policy_forward.1} parent=1 // pred_region
      _
    $region25: #{policy_forward.1} parent=1 // pred_fallthru
      _
    // Predicated region
    $region26: #{policy_forward.1} parent=1 // pred_check
      _
    $region27: #{policy_forward.1} parent=1 // pred_check_branch
      %61 = sbr.rel (0) target = $region29
    $region28: #{policy_forward.1} parent=1 // pred_region
      %s63 = ssub.s32 16, 16
      %64 = vsyncadd [#allocation8], %s63
      %s66 = sshll.u32 [#allocation7], 4
      %s67 = int_to_ptr.vmem [resolvable:$true] %s66
      %69 = dma.hbm_to_vmem [thread:$0]  %s6, 16, %s67, [#allocation8]
    $region29: #{policy_forward.1} parent=1 // pred_fallthru
      _
    // Predicated region
    $region30: #{policy_forward.1} parent=1 // pred_check
      _
    $region31: #{policy_forward.1} parent=1 // pred_check_branch
      %71 = sbr.rel (0) target = $region33
    $region32: #{policy_forward.1} parent=1 // pred_region
      %s73 = ssub.s32 256, 256
      %74 = vsyncadd [#allocation8], %s73
      %s75 = sshll.u32 [#allocation9], 4
      %s76 = int_to_ptr.vmem [resolvable:$true] %s75
      %81 = dma.hbm_to_vmem [thread:$0]  %s7, 256, %s76, [#allocation8], 128, 128, 8
    $region33: #{policy_forward.1} parent=1 // pred_fallthru
      _
    // Predicated region
    $region34: #{policy_forward.1} parent=1 // pred_check
      _
    $region35: #{policy_forward.1} parent=1 // pred_check_branch
      %83 = sbr.rel (0) target = $region37
    $region36: #{policy_forward.1} parent=1 // pred_region
      %s85 = ssub.s32 256, 256
      %86 = vsyncadd [#allocation11], %s85
      %s87 = sshll.u32 [#allocation10], 4
      %s88 = int_to_ptr.vmem [resolvable:$true] %s87
      %93 = dma.hbm_to_vmem [thread:$0]  %s8, 256, %s88, [#allocation11], 128, 128, 8
    $region37: #{policy_forward.1} parent=1 // pred_fallthru
      _
    // Predicated region
    $region38: #{policy_forward.1} parent=1 // pred_check
      _
    $region39: #{policy_forward.1} parent=1 // pred_check_branch
      %95 = sbr.rel (0) target = $region41
    $region40: #{policy_forward.1} parent=1 // pred_region
      _
    $region41: #{policy_forward.1} parent=1 // pred_fallthru
      _
    // Predicated region
    $region42: #{policy_forward.1} parent=1 // pred_check
      _
    $region43: #{policy_forward.1} parent=1 // pred_check_branch
      %97 = sbr.rel (0) target = $region45
    $region44: #{policy_forward.1} parent=1 // pred_region
      %s99 = ssub.s32 2048, 2048
      %100 = vsyncadd [#allocation11], %s99
      %s101 = sshll.u32 [#allocation12], 4
      %s102 = int_to_ptr.vmem [resolvable:$true] %s101
      %107 = dma.hbm_to_vmem [thread:$0]  %s10, 2048, %s102, [#allocation11], 128, 128, 8
    $region45: #{policy_forward.1} parent=1 // pred_fallthru
      _
    // Predicated region
    $region46: #{policy_forward.1} parent=1 // pred_check
      _
    $region47: #{policy_forward.1} parent=1 // pred_check_branch
      %109 = sbr.rel (0) target = $region49
    $region48: #{policy_forward.1} parent=1 // pred_region
      %110 = dma.done [#allocation3], 128
    $region49: #{policy_forward.1} parent=1 // pred_fallthru
      _
    // Predicated region
    $region50: #{policy_forward.1} parent=1 // pred_check
      _
    $region51: #{policy_forward.1} parent=1 // pred_check_branch
      %112 = sbr.rel (0) target = $region53
    $region52: #{policy_forward.1} parent=1 // pred_region
      %113 = dma.done [#allocation5], 128
    $region53: #{policy_forward.1} parent=1 // pred_fallthru
      _
    // Predicated region
    $region54: #{policy_forward.1} parent=1 // pred_check
      _
    $region55: #{policy_forward.1} parent=1 // pred_check_branch
      %115 = sbr.rel (0) target = $region57
    $region56: #{policy_forward.1} parent=1 // pred_region
      %116 = dma.done [#allocation5], 256
    $region57: #{policy_forward.1} parent=1 // pred_fallthru
      _
    // Predicated region
    $region58: #{policy_forward.1} parent=1 // pred_check
      _
    $region59: #{policy_forward.1} parent=1 // pred_check_branch
      %118 = sbr.rel (0) target = $region61
    $region60: #{policy_forward.1} parent=1 // pred_region
      %119 = dma.done [#allocation8], 16
    $region61: #{policy_forward.1} parent=1 // pred_fallthru
      _
    // Predicated region
    $region62: #{policy_forward.1} parent=1 // pred_check
      _
    $region63: #{policy_forward.1} parent=1 // pred_check_branch
      %121 = sbr.rel (0) target = $region65
    $region64: #{policy_forward.1} parent=1 // pred_region
      %122 = dma.done [#allocation8], 256
    $region65: #{policy_forward.1} parent=1 // pred_fallthru
      _
    // Predicated region
    $region66: #{policy_forward.1} parent=1 // pred_check
      _
    $region67: #{policy_forward.1} parent=1 // pred_check_branch
      %124 = sbr.rel (0) target = $region69
    $region68: #{policy_forward.1} parent=1 // pred_region
      %125 = dma.done [#allocation11], 256
    $region69: #{policy_forward.1} parent=1 // pred_fallthru
      _
    // Predicated region
    $region70: #{policy_forward.1} parent=1 // pred_check
      _
    $region71: #{policy_forward.1} parent=1 // pred_check_branch
      %127 = sbr.rel (0) target = $region73
    $region72: #{policy_forward.1} parent=1 // pred_region
      %128 = dma.done [#allocation11], 2048
    $region73: #{policy_forward.1} parent=1 // pred_fallthru
      _
    %v130 = vld [vmem:[#allocation2] sm:$0xff]
    %v131 = vpack.c.bf16 %v130, %v130
    %v132 = vld [vmem:[#allocation4] sm:$0xf]
    %v133 = vld [vmem:[#allocation4 + $0x4] sm:$0xf]
    %v134 = vld [vmem:[%s2] sm:$0x1]
    %v136 = vlaneseq
    %v137 = vshrl.u32 %v136, 7
    %v138 = vsub.s32 0, %v137
    %v139 = vrot.slane %v134, %v138
    %v143 = vunpack.c.l.b16 %v132
    %v144 = vunpack.c.l.b16 %v133
    %v145 = vpack.c.b16 %v144, %v143
    %vm147 = vcmask 130048
    %v149 = vsel %vm147, %v131, 0
    %151 = vmatprep.subr.bf16.mxu0 0
    %152 = vmatpush1.bf16.msra.mxu0 %v145
    %153 = vmatprep.subr.bf16.mxu0 0
    %154 = vmatpush1.bf16.msra.mxu0 0
    %155 = vmatprep.subr.bf16.mxu0 0
    %156 = vmatpush1.bf16.msra.mxu0 0
    %157 = vmatprep.subr.bf16.mxu0 0
    %158 = vmatpush1.bf16.msra.mxu0 0
    %159 = vmatprep.subr.bf16.mxu0 0
    %160 = vmatpush1.bf16.msra.mxu0 0
    %161 = vmatprep.subr.bf16.mxu0 0
    %162 = vmatpush1.bf16.msra.mxu0 0
    %163 = vmatprep.subr.bf16.mxu0 0
    %164 = vmatpush1.bf16.msra.mxu0 0
    %165 = vmatprep.subr.bf16.mxu0 0
    %166 = vmatpush1.bf16.msra.mxu0 0
    %167 = vmatprep.subr.bf16.mxu0 0
    %168 = vmatpush1.bf16.msra.mxu0 0
    %169 = vmatprep.subr.bf16.mxu0 0
    %170 = vmatpush1.bf16.msra.mxu0 0
    %171 = vmatprep.subr.bf16.mxu0 0
    %172 = vmatpush1.bf16.msra.mxu0 0
    %173 = vmatprep.subr.bf16.mxu0 0
    %174 = vmatpush1.bf16.msra.mxu0 0
    %175 = vmatprep.subr.bf16.mxu0 0
    %176 = vmatpush1.bf16.msra.mxu0 0
    %177 = vmatprep.subr.bf16.mxu0 0
    %178 = vmatpush1.bf16.msra.mxu0 0
    %179 = vmatprep.subr.bf16.mxu0 0
    %180 = vmatpush1.bf16.msra.mxu0 0
    %181 = vmatprep.subr.bf16.mxu0 0
    %182 = vmatpush1.bf16.msra.mxu0 0
    %183 = vmatprep.mubr.bf16.mxu0 0
    %184 = vmatmul.mubr.bf16.gmra.mrb[0].mxu0 %v149
    %v185 = vpop.f32.mrb[0].mxu0
    %v186 = vadd.f32 %v139, %v185
    %v187 = vpop.f32.mrb[0].mxu0
    %v188 = vpop.f32.mrb[0].mxu0
    %v189 = vpop.f32.mrb[0].mxu0
    %190 = vdwg.mxu0
    %v191 = vmul.f32 %v186, 0.2
    %v192 = vmax.f32 %v186, %v191
    %v193 = vpack.c.bf16 %v192, %v192
    %v194 = vld [vmem:[#allocation6] sm:$0xf]
    %v195 = vld [vmem:[#allocation6 + $0x4] sm:$0xf]
    %v196 = vld [vmem:[#allocation6 + $0x8] sm:$0xf]
    %v197 = vld [vmem:[#allocation6 + $0xc] sm:$0xf]
    %v198 = vld [vmem:[%s4] sm:$0x1]
    %v200 = vlaneseq
    %v201 = vshrl.u32 %v200, 7
    %v202 = vsub.s32 0, %v201
    %v203 = vrot.slane %v198, %v202
    %v209 = vunpack.c.l.b16 %v194
    %v210 = vunpack.c.l.b16 %v195
    %v211 = vunpack.c.l.b16 %v196
    %v212 = vunpack.c.l.b16 %v197
    %v213 = vpack.c.b16 %v210, %v209
    %v214 = vpack.c.b16 %v212, %v211
    %vm217 = vcmask 261120
    %v219 = vsel %vm217, %v193, 0
    %221 = vmatprep.subr.bf16.mxu0 0
    %222 = vmatpush1.bf16.msra.mxu0 %v213
    %223 = vmatprep.subr.bf16.mxu0 0
    %224 = vmatpush1.bf16.msra.mxu0 %v214
    %225 = vmatprep.subr.bf16.mxu0 0
    %226 = vmatpush1.bf16.msra.mxu0 0
    %227 = vmatprep.subr.bf16.mxu0 0
    %228 = vmatpush1.bf16.msra.mxu0 0
    %229 = vmatprep.subr.bf16.mxu0 0
    %230 = vmatpush1.bf16.msra.mxu0 0
    %231 = vmatprep.subr.bf16.mxu0 0
    %232 = vmatpush1.bf16.msra.mxu0 0
    %233 = vmatprep.subr.bf16.mxu0 0
    %234 = vmatpush1.bf16.msra.mxu0 0
    %235 = vmatprep.subr.bf16.mxu0 0
    %236 = vmatpush1.bf16.msra.mxu0 0
    %237 = vmatprep.subr.bf16.mxu0 0
    %238 = vmatpush1.bf16.msra.mxu0 0
    %239 = vmatprep.subr.bf16.mxu0 0
    %240 = vmatpush1.bf16.msra.mxu0 0
    %241 = vmatprep.subr.bf16.mxu0 0
    %242 = vmatpush1.bf16.msra.mxu0 0
    %243 = vmatprep.subr.bf16.mxu0 0
    %244 = vmatpush1.bf16.msra.mxu0 0
    %245 = vmatprep.subr.bf16.mxu0 0
    %246 = vmatpush1.bf16.msra.mxu0 0
    %247 = vmatprep.subr.bf16.mxu0 0
    %248 = vmatpush1.bf16.msra.mxu0 0
    %249 = vmatprep.subr.bf16.mxu0 0
    %250 = vmatpush1.bf16.msra.mxu0 0
    %251 = vmatprep.subr.bf16.mxu0 0
    %252 = vmatpush1.bf16.msra.mxu0 0
    %253 = vmatprep.mubr.bf16.mxu0 0
    %254 = vmatmul.mubr.bf16.gmra.mrb[0].mxu0 %v219
    %v255 = vpop.f32.mrb[0].mxu0
    %v256 = vadd.f32 %v203, %v255
    %v257 = vpop.f32.mrb[0].mxu0
    %v258 = vpop.f32.mrb[0].mxu0
    %v259 = vpop.f32.mrb[0].mxu0
    %260 = vdwg.mxu0
    %v261 = vmul.f32 %v256, 0.2
    %v262 = vmax.f32 %v256, %v261
    %v263 = vpack.c.bf16 %v262, %v262
    %v264 = vld [vmem:[%s5] sm:$0xf]
    %v265 = vld [vmem:[%s5 + $0x4] sm:$0xf]
    %v266 = vld [vmem:[%s5 + $0x8] sm:$0xf]
    %v267 = vld [vmem:[%s5 + $0xc] sm:$0xf]
    %v268 = vld [vmem:[#allocation7] sm:$0x1]
    %v270 = vlaneseq
    %v271 = vshrl.u32 %v270, 7
    %v272 = vsub.s32 0, %v271
    %v273 = vrot.slane %v268, %v272
    %v279 = vunpack.c.l.b16 %v264
    %v280 = vunpack.c.l.b16 %v265
    %v281 = vunpack.c.l.b16 %v266
    %v282 = vunpack.c.l.b16 %v267
    %v283 = vpack.c.b16 %v280, %v279
    %v284 = vpack.c.b16 %v282, %v281
    %v288 = vsel %vm217, %v263, 0
    %290 = vmatprep.subr.bf16.mxu0 0
    %291 = vmatpush1.bf16.msra.mxu0 %v283
    %292 = vmatprep.subr.bf16.mxu0 0
    %293 = vmatpush1.bf16.msra.mxu0 %v284
    %294 = vmatprep.subr.bf16.mxu0 0
    %295 = vmatpush1.bf16.msra.mxu0 0
    %296 = vmatprep.subr.bf16.mxu0 0
    %297 = vmatpush1.bf16.msra.mxu0 0
    %298 = vmatprep.subr.bf16.mxu0 0
    %299 = vmatpush1.bf16.msra.mxu0 0
    %300 = vmatprep.subr.bf16.mxu0 0
    %301 = vmatpush1.bf16.msra.mxu0 0
    %302 = vmatprep.subr.bf16.mxu0 0
    %303 = vmatpush1.bf16.msra.mxu0 0
    %304 = vmatprep.subr.bf16.mxu0 0
    %305 = vmatpush1.bf16.msra.mxu0 0
    %306 = vmatprep.subr.bf16.mxu0 0
    %307 = vmatpush1.bf16.msra.mxu0 0
    %308 = vmatprep.subr.bf16.mxu0 0
    %309 = vmatpush1.bf16.msra.mxu0 0
    %310 = vmatprep.subr.bf16.mxu0 0
    %311 = vmatpush1.bf16.msra.mxu0 0
    %312 = vmatprep.subr.bf16.mxu0 0
    %313 = vmatpush1.bf16.msra.mxu0 0
    %314 = vmatprep.subr.bf16.mxu0 0
    %315 = vmatpush1.bf16.msra.mxu0 0
    %316 = vmatprep.subr.bf16.mxu0 0
    %317 = vmatpush1.bf16.msra.mxu0 0
    %318 = vmatprep.subr.bf16.mxu0 0
    %319 = vmatpush1.bf16.msra.mxu0 0
    %320 = vmatprep.subr.bf16.mxu0 0
    %321 = vmatpush1.bf16.msra.mxu0 0
    %322 = vmatprep.mubr.bf16.mxu0 0
    %323 = vmatmul.mubr.bf16.gmra.mrb[0].mxu0 %v288
    %v324 = vpop.f32.mrb[0].mxu0
    %v325 = vadd.f32 %v273, %v324
    %v326 = vpop.f32.mrb[0].mxu0
    %v327 = vpop.f32.mrb[0].mxu0
    %v328 = vpop.f32.mrb[0].mxu0
    %329 = vdwg.mxu0
    %331 = vrot.lane.b32.xlu0 %v325, 112
    %v332 = vpop.permute.xlu0 %331
    %v334 = vmax.f32 %v325, %v332
    %335 = vrot.lane.b32.xlu0 %v325, 96
    %v336 = vpop.permute.xlu0 %335
    %v338 = vmax.f32 %v334, %v336
    %v339 = vsub.f32 %v325, %v338
    %v340 = vmul.f32 %v339, 1.442695
    %v341 = vpow.pop %v340
    %343 = vrot.lane.b32.xlu0 %v338, 16
    %v344 = vpop.permute.xlu0 %343
    %v346 = vsub.f32 %v325, %v344
    %v347 = vmul.f32 %v346, 1.442695
    %v348 = vpow.pop %v347
    %349 = vrot.lane.b32.xlu0 %v338, 32
    %v350 = vpop.permute.xlu0 %349
    %v352 = vsub.f32 %v325, %v350
    %v353 = vmul.f32 %v352, 1.442695
    %v354 = vpow.pop %v353
    %v355 = vld [vmem:[#allocation9] sm:$0xff]
    %v356 = vld [vmem:[#allocation9 + $0x8] sm:$0xff]
    %v357 = vld [vmem:[#allocation10] sm:$0xff]
    %v358 = vld [vmem:[#allocation10 + $0x8] sm:$0xff]
    %360 = vrot.lane.b32.xlu0 %v348, 112
    %v361 = vpop.permute.xlu0 %360
    %v362 = vsel %vm147, %v361, 0
    %364 = vmatprep.subr.mxu0 0.0
    %365 = vmatpush1.msra.mxu0 %v357
    %366 = vmatprep.subr.mxu0 0.0
    %367 = vmatpush1.msra.mxu0 %v358
    %368 = vmatprep.subr.mxu0 0.0
    %369 = vmatpush1.msra.mxu0 0.0
    %370 = vmatprep.subr.mxu0 0.0
    %371 = vmatpush1.msra.mxu0 0.0
    %372 = vmatprep.subr.mxu0 0.0
    %373 = vmatpush1.msra.mxu0 0.0
    %374 = vmatprep.subr.mxu0 0.0
    %375 = vmatpush1.msra.mxu0 0.0
    %376 = vmatprep.subr.mxu0 0.0
    %377 = vmatpush1.msra.mxu0 0.0
    %378 = vmatprep.subr.mxu0 0.0
    %379 = vmatpush1.msra.mxu0 0.0
    %380 = vmatprep.subr.mxu0 0.0
    %381 = vmatpush1.msra.mxu0 0.0
    %382 = vmatprep.subr.mxu0 0.0
    %383 = vmatpush1.msra.mxu0 0.0
    %384 = vmatprep.subr.mxu0 0.0
    %385 = vmatpush1.msra.mxu0 0.0
    %386 = vmatprep.subr.mxu0 0.0
    %387 = vmatpush1.msra.mxu0 0.0
    %388 = vmatprep.subr.mxu0 0.0
    %389 = vmatpush1.msra.mxu0 0.0
    %390 = vmatprep.subr.mxu0 0.0
    %391 = vmatpush1.msra.mxu0 0.0
    %392 = vmatprep.subr.mxu0 0.0
    %393 = vmatpush1.msra.mxu0 0.0
    %394 = vmatprep.subr.mxu0 0.0
    %395 = vmatpush1.msra.mxu0 0.0
    %396 = vmatprep.subr.mxu0 0.0
    %397 = vmatpush1.msra.mxu0 0.0
    %398 = vmatprep.subr.mxu0 0.0
    %399 = vmatpush1.msra.mxu0 0.0
    %400 = vmatprep.subr.mxu0 0.0
    %401 = vmatpush1.msra.mxu0 0.0
    %402 = vmatprep.subr.mxu0 0.0
    %403 = vmatpush1.msra.mxu0 0.0
    %404 = vmatprep.subr.mxu0 0.0
    %405 = vmatpush1.msra.mxu0 0.0
    %406 = vmatprep.subr.mxu0 0.0
    %407 = vmatpush1.msra.mxu0 0.0
    %408 = vmatprep.subr.mxu0 0.0
    %409 = vmatpush1.msra.mxu0 0.0
    %410 = vmatprep.subr.mxu0 0.0
    %411 = vmatpush1.msra.mxu0 0.0
    %412 = vmatprep.subr.mxu0 0.0
    %413 = vmatpush1.msra.mxu0 0.0
    %414 = vmatprep.subr.mxu0 0.0
    %415 = vmatpush1.msra.mxu0 0.0
    %416 = vmatprep.subr.mxu0 0.0
    %417 = vmatpush1.msra.mxu0 0.0
    %418 = vmatprep.subr.mxu0 0.0
    %419 = vmatpush1.msra.mxu0 0.0
    %420 = vmatprep.subr.mxu0 0.0
    %421 = vmatpush1.msra.mxu0 0.0
    %422 = vmatprep.subr.mxu0 0.0
    %423 = vmatpush1.msra.mxu0 0.0
    %424 = vmatprep.subr.mxu0 0.0
    %425 = vmatpush1.msra.mxu0 0.0
    %426 = vmatprep.subr.mxu0 0.0
    %427 = vmatpush1.msra.mxu0 0.0
    %428 = vmatprep.mubr.f32.mxu0 0.0
    %429 = vmatmul.mubr.f32.gmra.mrb[0].mxu0 %v362
    %v430 = vpop.f32.mrb[0].mxu0
    %v431 = vadd.f32 0.0, %v430
    %v432 = vpop.f32.mrb[0].mxu0
    %433 = vdwg.mxu0
    %v435 = vsel %vm147, %v341, 0
    %437 = vmatprep.subr.mxu0 0.0
    %438 = vmatpush1.msra.mxu0 %v355
    %439 = vmatprep.subr.mxu0 0.0
    %440 = vmatpush1.msra.mxu0 %v356
    %441 = vmatprep.subr.mxu0 0.0
    %442 = vmatpush1.msra.mxu0 0.0
    %443 = vmatprep.subr.mxu0 0.0
    %444 = vmatpush1.msra.mxu0 0.0
    %445 = vmatprep.subr.mxu0 0.0
    %446 = vmatpush1.msra.mxu0 0.0
    %447 = vmatprep.subr.mxu0 0.0
    %448 = vmatpush1.msra.mxu0 0.0
    %449 = vmatprep.subr.mxu0 0.0
    %450 = vmatpush1.msra.mxu0 0.0
    %451 = vmatprep.subr.mxu0 0.0
    %452 = vmatpush1.msra.mxu0 0.0
    %453 = vmatprep.subr.mxu0 0.0
    %454 = vmatpush1.msra.mxu0 0.0
    %455 = vmatprep.subr.mxu0 0.0
    %456 = vmatpush1.msra.mxu0 0.0
    %457 = vmatprep.subr.mxu0 0.0
    %458 = vmatpush1.msra.mxu0 0.0
    %459 = vmatprep.subr.mxu0 0.0
    %460 = vmatpush1.msra.mxu0 0.0
    %461 = vmatprep.subr.mxu0 0.0
    %462 = vmatpush1.msra.mxu0 0.0
    %463 = vmatprep.subr.mxu0 0.0
    %464 = vmatpush1.msra.mxu0 0.0
    %465 = vmatprep.subr.mxu0 0.0
    %466 = vmatpush1.msra.mxu0 0.0
    %467 = vmatprep.subr.mxu0 0.0
    %468 = vmatpush1.msra.mxu0 0.0
    %469 = vmatprep.subr.mxu0 0.0
    %470 = vmatpush1.msra.mxu0 0.0
    %471 = vmatprep.subr.mxu0 0.0
    %472 = vmatpush1.msra.mxu0 0.0
    %473 = vmatprep.subr.mxu0 0.0
    %474 = vmatpush1.msra.mxu0 0.0
    %475 = vmatprep.subr.mxu0 0.0
    %476 = vmatpush1.msra.mxu0 0.0
    %477 = vmatprep.subr.mxu0 0.0
    %478 = vmatpush1.msra.mxu0 0.0
    %479 = vmatprep.subr.mxu0 0.0
    %480 = vmatpush1.msra.mxu0 0.0
    %481 = vmatprep.subr.mxu0 0.0
    %482 = vmatpush1.msra.mxu0 0.0
    %483 = vmatprep.subr.mxu0 0.0
    %484 = vmatpush1.msra.mxu0 0.0
    %485 = vmatprep.subr.mxu0 0.0
    %486 = vmatpush1.msra.mxu0 0.0
    %487 = vmatprep.subr.mxu0 0.0
    %488 = vmatpush1.msra.mxu0 0.0
    %489 = vmatprep.subr.mxu0 0.0
    %490 = vmatpush1.msra.mxu0 0.0
    %491 = vmatprep.subr.mxu0 0.0
    %492 = vmatpush1.msra.mxu0 0.0
    %493 = vmatprep.subr.mxu0 0.0
    %494 = vmatpush1.msra.mxu0 0.0
    %495 = vmatprep.subr.mxu0 0.0
    %496 = vmatpush1.msra.mxu0 0.0
    %497 = vmatprep.subr.mxu0 0.0
    %498 = vmatpush1.msra.mxu0 0.0
    %499 = vmatprep.subr.mxu0 0.0
    %500 = vmatpush1.msra.mxu0 0.0
    %501 = vmatprep.mubr.f32.mxu0 0.0
    %502 = vmatmul.mubr.f32.gmra.mrb[0].mxu0 %v435
    %v503 = vpop.f32.mrb[0].mxu0
    %v504 = vadd.f32 %v431, %v503
    %v505 = vpop.f32.mrb[0].mxu0
    %506 = vdwg.mxu0
    %v507 = vld [vmem:[%s9] sm:$0xff]
    %v508 = vld [vmem:[%s9 + $0x8] sm:$0xff]
    %510 = vrot.lane.b32.xlu0 %v354, 96
    %v511 = vpop.permute.xlu0 %510
    %v512 = vsel %vm147, %v511, 0
    %514 = vmatprep.subr.mxu0 0.0
    %515 = vmatpush1.msra.mxu0 %v507
    %516 = vmatprep.subr.mxu0 0.0
    %517 = vmatpush1.msra.mxu0 %v508
    %518 = vmatprep.subr.mxu0 0.0
    %519 = vmatpush1.msra.mxu0 0.0
    %520 = vmatprep.subr.mxu0 0.0
    %521 = vmatpush1.msra.mxu0 0.0
    %522 = vmatprep.subr.mxu0 0.0
    %523 = vmatpush1.msra.mxu0 0.0
    %524 = vmatprep.subr.mxu0 0.0
    %525 = vmatpush1.msra.mxu0 0.0
    %526 = vmatprep.subr.mxu0 0.0
    %527 = vmatpush1.msra.mxu0 0.0
    %528 = vmatprep.subr.mxu0 0.0
    %529 = vmatpush1.msra.mxu0 0.0
    %530 = vmatprep.subr.mxu0 0.0
    %531 = vmatpush1.msra.mxu0 0.0
    %532 = vmatprep.subr.mxu0 0.0
    %533 = vmatpush1.msra.mxu0 0.0
    %534 = vmatprep.subr.mxu0 0.0
    %535 = vmatpush1.msra.mxu0 0.0
    %536 = vmatprep.subr.mxu0 0.0
    %537 = vmatpush1.msra.mxu0 0.0
    %538 = vmatprep.subr.mxu0 0.0
    %539 = vmatpush1.msra.mxu0 0.0
    %540 = vmatprep.subr.mxu0 0.0
    %541 = vmatpush1.msra.mxu0 0.0
    %542 = vmatprep.subr.mxu0 0.0
    %543 = vmatpush1.msra.mxu0 0.0
    %544 = vmatprep.subr.mxu0 0.0
    %545 = vmatpush1.msra.mxu0 0.0
    %546 = vmatprep.subr.mxu0 0.0
    %547 = vmatpush1.msra.mxu0 0.0
    %548 = vmatprep.subr.mxu0 0.0
    %549 = vmatpush1.msra.mxu0 0.0
    %550 = vmatprep.subr.mxu0 0.0
    %551 = vmatpush1.msra.mxu0 0.0
    %552 = vmatprep.subr.mxu0 0.0
    %553 = vmatpush1.msra.mxu0 0.0
    %554 = vmatprep.subr.mxu0 0.0
    %555 = vmatpush1.msra.mxu0 0.0
    %556 = vmatprep.subr.mxu0 0.0
    %557 = vmatpush1.msra.mxu0 0.0
    %558 = vmatprep.subr.mxu0 0.0
    %559 = vmatpush1.msra.mxu0 0.0
    %560 = vmatprep.subr.mxu0 0.0
    %561 = vmatpush1.msra.mxu0 0.0
    %562 = vmatprep.subr.mxu0 0.0
    %563 = vmatpush1.msra.mxu0 0.0
    %564 = vmatprep.subr.mxu0 0.0
    %565 = vmatpush1.msra.mxu0 0.0
    %566 = vmatprep.subr.mxu0 0.0
    %567 = vmatpush1.msra.mxu0 0.0
    %568 = vmatprep.subr.mxu0 0.0
    %569 = vmatpush1.msra.mxu0 0.0
    %570 = vmatprep.subr.mxu0 0.0
    %571 = vmatpush1.msra.mxu0 0.0
    %572 = vmatprep.subr.mxu0 0.0
    %573 = vmatpush1.msra.mxu0 0.0
    %574 = vmatprep.subr.mxu0 0.0
    %575 = vmatpush1.msra.mxu0 0.0
    %576 = vmatprep.subr.mxu0 0.0
    %577 = vmatpush1.msra.mxu0 0.0
    %578 = vmatprep.mubr.f32.mxu0 0.0
    %579 = vmatmul.mubr.f32.gmra.mrb[0].mxu0 %v512
    %v580 = vpop.f32.mrb[0].mxu0
    %v581 = vadd.f32 0.0, %v580
    %v582 = vpop.f32.mrb[0].mxu0
    %583 = vdwg.mxu0
    %v584 = vadd.f32 %v504, %v581
    %v585 = vld [vmem:[#allocation12] sm:$0xff]
    %v586 = vld [vmem:[#allocation12 + $0x8] sm:$0xff]
    %v587 = vld [vmem:[#allocation12 + $0x10] sm:$0xff]
    %v588 = vld [vmem:[#allocation12 + $0x18] sm:$0xff]
    %v589 = vld [vmem:[#allocation12 + $0x20] sm:$0xff]
    %v590 = vld [vmem:[#allocation12 + $0x28] sm:$0xff]
    %v591 = vld [vmem:[#allocation12 + $0x30] sm:$0xff]
    %v592 = vld [vmem:[#allocation12 + $0x38] sm:$0xff]
    %v593 = vld [vmem:[#allocation12 + $0x40] sm:$0xff]
    %v594 = vld [vmem:[#allocation12 + $0x48] sm:$0xff]
    %v595 = vld [vmem:[#allocation12 + $0x50] sm:$0xff]
    %v596 = vld [vmem:[#allocation12 + $0x58] sm:$0xff]
    %v597 = vld [vmem:[#allocation12 + $0x60] sm:$0xff]
    %v598 = vld [vmem:[#allocation12 + $0x68] sm:$0xff]
    %v599 = vld [vmem:[#allocation12 + $0x70] sm:$0xff]
    %v600 = vld [vmem:[#allocation12 + $0x78] sm:$0xff]
    %601 = vmatprep.subr.mxu0 0.0
    %602 = vmatpush1.msra.mxu0 %v585
    %603 = vmatprep.subr.mxu0 0.0
    %604 = vmatpush1.msra.mxu0 %v586
    %605 = vmatprep.subr.mxu0 0.0
    %606 = vmatpush1.msra.mxu0 %v587
    %607 = vmatprep.subr.mxu0 0.0
    %608 = vmatpush1.msra.mxu0 %v588
    %609 = vmatprep.subr.mxu0 0.0
    %610 = vmatpush1.msra.mxu0 %v589
    %611 = vmatprep.subr.mxu0 0.0
    %612 = vmatpush1.msra.mxu0 %v590
    %613 = vmatprep.subr.mxu0 0.0
    %614 = vmatpush1.msra.mxu0 %v591
    %615 = vmatprep.subr.mxu0 0.0
    %616 = vmatpush1.msra.mxu0 %v592
    %617 = vmatprep.subr.mxu0 0.0
    %618 = vmatpush1.msra.mxu0 %v593
    %619 = vmatprep.subr.mxu0 0.0
    %620 = vmatpush1.msra.mxu0 %v594
    %621 = vmatprep.subr.mxu0 0.0
    %622 = vmatpush1.msra.mxu0 %v595
    %623 = vmatprep.subr.mxu0 0.0
    %624 = vmatpush1.msra.mxu0 %v596
    %625 = vmatprep.subr.mxu0 0.0
    %626 = vmatpush1.msra.mxu0 %v597
    %627 = vmatprep.subr.mxu0 0.0
    %628 = vmatpush1.msra.mxu0 %v598
    %629 = vmatprep.subr.mxu0 0.0
    %630 = vmatpush1.msra.mxu0 %v599
    %631 = vmatprep.subr.mxu0 0.0
    %632 = vmatpush1.msra.mxu0 %v600
    %633 = vmatprep.subr.mxu0 0.0
    %634 = vmatpush1.msra.mxu0 0.0
    %635 = vmatprep.subr.mxu0 0.0
    %636 = vmatpush1.msra.mxu0 0.0
    %637 = vmatprep.subr.mxu0 0.0
    %638 = vmatpush1.msra.mxu0 0.0
    %639 = vmatprep.subr.mxu0 0.0
    %640 = vmatpush1.msra.mxu0 0.0
    %641 = vmatprep.subr.mxu0 0.0
    %642 = vmatpush1.msra.mxu0 0.0
    %643 = vmatprep.subr.mxu0 0.0
    %644 = vmatpush1.msra.mxu0 0.0
    %645 = vmatprep.subr.mxu0 0.0
    %646 = vmatpush1.msra.mxu0 0.0
    %647 = vmatprep.subr.mxu0 0.0
    %648 = vmatpush1.msra.mxu0 0.0
    %649 = vmatprep.subr.mxu0 0.0
    %650 = vmatpush1.msra.mxu0 0.0
    %651 = vmatprep.subr.mxu0 0.0
    %652 = vmatpush1.msra.mxu0 0.0
    %653 = vmatprep.subr.mxu0 0.0
    %654 = vmatpush1.msra.mxu0 0.0
    %655 = vmatprep.subr.mxu0 0.0
    %656 = vmatpush1.msra.mxu0 0.0
    %657 = vmatprep.subr.mxu0 0.0
    %658 = vmatpush1.msra.mxu0 0.0
    %659 = vmatprep.subr.mxu0 0.0
    %660 = vmatpush1.msra.mxu0 0.0
    %661 = vmatprep.subr.mxu0 0.0
    %662 = vmatpush1.msra.mxu0 0.0
    %663 = vmatprep.subr.mxu0 0.0
    %664 = vmatpush1.msra.mxu0 0.0
    %665 = vmatprep.mubr.f32.mxu0 0.0
    %666 = vmatmul.mubr.f32.gmra.mrb[0].mxu0 %v584
    %v667 = vpop.f32.mrb[0].mxu0
    %v668 = vadd.f32 0.0, %v667
    %v669 = vpop.f32.mrb[0].mxu0
    %670 = vdwg.mxu0
    %vm671 = vcmp.gt.f32.partialorder %v668, 0.0
    %v672 = vsel %vm671, %v668, 1.0
    %v673 = vrcp.pop %v672
    %v674 = vmul.f32 %v584, %v673
    %675 = vst [vmem:[%s11] sm:$0xff] %v674
    // Predicated region
    $region74: #{policy_forward.1} parent=1 // pred_check
      _
    $region75: #{policy_forward.1} parent=1 // pred_check_branch
      %677 = sbr.rel (0) target = $region77
    $region76: #{policy_forward.1} parent=1 // pred_region
      _
    $region77: #{policy_forward.1} parent=1 // pred_fallthru
      _
    // Predicated region
    $region78: #{policy_forward.1} parent=1 // pred_check
      _
    $region79: #{policy_forward.1} parent=1 // pred_check_branch
      %679 = sbr.rel (0) target = $region81
    $region80: #{policy_forward.1} parent=1 // pred_region
      _
    $region81: #{policy_forward.1} parent=1 // pred_fallthru
      _
    %680 = vsyncpa [#allocation3], 1
    %681 = vsyncpa [#allocation5], 1
    %682 = vsyncpa [#allocation8], 1
    %683 = vsyncpa [#allocation11], 1

</llo_original>
